<compile_context>
chip_gen: v7x
topology: tpu7x:2x2x1
jax: 0.10.0
libtpu: 0.0.40
codegen_flags: <defaults>
</compile_context>

<pallas_src>
import jax
import jax.numpy as jnp
from jax.experimental import pallas as pl
from jax.experimental.pallas import tpu as pltpu


def _attentive_pool_kernel(hs_ref, bias_ref, w1_ref, b1_ref, w2_ref, out_ref):
    # hs_ref:   (TB, S, H)  hidden states in their native (matmul) dtype
    # bias_ref: (TB, S)     additive mask bias (0 valid / -1e9 masked), f32
    # w1_ref:   (H, H2p)    first Linear weight (H2 zero-padded to H2p), matmul dtype
    # b1_ref:   (1, H2p)    first Linear bias, f32 (padding = 0)
    # w2_ref:   (1, H2p)    second Linear weight as a row, f32 (padding = 0)
    # out_ref:  (TB, H)     pooled outputs, f32
    TB, S, H = hs_ref.shape
    H2p = w1_ref.shape[1]

    hs = hs_ref[...]                                            # (TB, S, H)

    # ---- Linear(H, H2) on the MXU: one (TB*S, H) @ (H, H2p) matmul ---------
    h = jnp.dot(hs.reshape(TB * S, H), w1_ref[...],
                preferred_element_type=jnp.float32)             # (TB*S, H2p) f32
    # NOTE: tanh goes through the single EUP pipe; for modest H it (not the
    # MXU) can be the binding slot -- keep H2 padding at the minimum lane
    # multiple (done in the wrapper).
    h = jnp.tanh(h + b1_ref[...])                               # (TB*S, H2p) f32

    # ---- Linear(H2, 1): N=1 matmul -> VPU multiply + lane reduce -----------
    scores = jnp.sum(h.reshape(TB, S, H2p) * w2_ref[...], axis=-1)   # (TB, S)

    # ---- masked_fill(mask == 0, -1e9), precomputed as an additive bias -----
    scores = scores + bias_ref[...]

    # ---- softmax over the sequence axis (lanes) -----------------------------
    m = jnp.max(scores, axis=-1, keepdims=True)                 # (TB, 1)
    e = jnp.exp(scores - m)                                     # (TB, S)
    denom = jnp.sum(e, axis=-1, keepdims=True)                  # (TB, 1)

    # ---- pooled = sum_s softmax(s) * hs[:, s, :] ----------------------------
    # VPU broadcast-multiply + sublane reduce over S on the resident block
    # (no degenerate M=1 MXU matmuls, no relayout of the (TB, S) weights).
    acc = jnp.sum(e[:, :, None] * hs.astype(jnp.float32), axis=1)    # (TB, H) f32

    # Normalize once per output element; approx reciprocal uses the idle EUP.
    out_ref[...] = (acc * pl.reciprocal(denom, approx=True)).astype(out_ref.dtype)


def _round_up(x, m):
    return (x + m - 1) // m * m


def _choose_batch_tile(B, row_bytes, target_bytes):
    """Pick TB (batch rows per grid step).

    Multiple of 8 (so the (TB, S) / (TB, H) blocks satisfy the (8, 128) rule),
    ~target_bytes of hidden_states per block (big DMAs, amortized ~0.35us/step
    grid overhead), and >= 2 grid steps when B allows so ("parallel",) can
    split the batch across v7x's two TensorCores.
    """
    if B <= 8:
        return B, B
    tb = max(8, min(512, target_bytes // max(row_bytes, 1)))
    tb = (tb // 8) * 8
    tb = min(tb, max(8, _round_up((B + 1) // 2, 8)))      # keep >= 2 grid steps
    while tb > 8 and (-B) % tb > B // 4:                   # cap padding waste
        tb = max(8, (tb // 2) // 8 * 8)
    return tb, _round_up(B, tb)


def attentive_pooling(hidden_states, attention_mask, w1, b1, w2, b2=None, *,
                      matmul_dtype=None, target_block_bytes=2 << 20):
    """hidden_states: [B, S, H]; attention_mask: [B, S] (or None) -> [B, H] f32.

    Mirrors AttentivePooling.forward.  `b2` is accepted but elided: a constant
    added to every score cancels exactly under the softmax.  Pass
    matmul_dtype=jnp.bfloat16 to down-cast f32 sources for the MXU stream.
    """
    B, S, H = hidden_states.shape
    H2 = w1.shape[1]
    del b2  # constant shift of every score -> cancels under softmax

    # --- dtype: stream hidden_states / W1 in their (bf16-friendly) matmul
    # dtype; everything elementwise stays f32 inside the kernel.
    if matmul_dtype is not None:
        hidden_states = hidden_states.astype(matmul_dtype)
    compute_dtype = hidden_states.dtype
    itemsize = jnp.dtype(compute_dtype).itemsize

    # --- mask as an additive bias (0 / -1e9), lane-dense (B, S) ------------
    if attention_mask is None:
        bias = jnp.zeros((B, S), jnp.float32)
    else:
        bias = jnp.where(attention_mask == 0,
                         jnp.float32(-1e9), jnp.float32(0.0)).astype(jnp.float32)

    # --- pad H2 to a lane multiple (padded columns contribute exactly 0) ----
    H2p = _round_up(H2, 128)
    w1p = jnp.pad(w1.astype(compute_dtype), ((0, 0), (0, H2p - H2)))
    b1p = jnp.pad(b1.reshape(1, H2).astype(jnp.float32), ((0, 0), (0, H2p - H2)))
    w2p = jnp.pad(w2.reshape(1, H2).astype(jnp.float32), ((0, 0), (0, H2p - H2)))

    # --- batch tiling --------------------------------------------------------
    TB, Bp = _choose_batch_tile(B, S * H * itemsize, target_block_bytes)
    if Bp != B:
        hidden_states = jnp.pad(hidden_states, ((0, Bp - B), (0, 0), (0, 0)))
        bias = jnp.pad(bias, ((0, Bp - B), (0, 0)))

    # --- explicit VMEM budget: 2x double-buffered streams + f32 intermediates
    # + weights + slack (v5e scoped default is 16 MiB; cap well under v7x's
    # 64 MiB physical VMEM).
    hs_block = TB * S * H * itemsize
    f32_block = TB * S * H * 4
    misc = 2 * (TB * S * 4 + TB * H * 4) + 2 * (H * H2p * itemsize + 2 * H2p * 4)
    need = 2 * hs_block + 3 * f32_block + misc + (2 << 20)
    vmem_limit = int(min(max(need, 32 << 20), 48 << 20))

    # TODO(synk): for very long sequences on v7x (64 MiB VMEM), add an
    # S-chunked inner loop with online-softmax accumulators instead of holding
    # the full (TB, S, H) block.
    out = pl.pallas_call(
        _attentive_pool_kernel,
        out_shape=jax.ShapeDtypeStruct((Bp, H), jnp.float32),
        grid=(Bp // TB,),
        in_specs=[
            pl.BlockSpec((TB, S, H), lambda b: (b, 0, 0)),    # hidden_states stream
            pl.BlockSpec((TB, S), lambda b: (b, 0)),          # additive mask bias
            # Constant-index weight specs; could be single-buffered
            # (pipeline_mode=pl.Buffered(1)) to reclaim VMEM when H*H2 is large.
            pl.BlockSpec((H, H2p), lambda b: (0, 0)),         # W1
            pl.BlockSpec((1, H2p), lambda b: (0, 0)),         # b1
            pl.BlockSpec((1, H2p), lambda b: (0, 0)),         # w2 row
        ],
        out_specs=pl.BlockSpec((TB, H), lambda b: (b, 0)),
        compiler_params=pltpu.CompilerParams(
            dimension_semantics=("parallel",),
            vmem_limit_bytes=vmem_limit),
    )(hidden_states, bias, w1p, b1p, w2p)
    return out[:B]


def _reference(hidden_states, attention_mask, w1, b1, w2, b2):
    """Pure-JAX reference mirroring the PyTorch forward (keeps b2)."""
    h = jnp.tanh(hidden_states @ w1 + b1)
    scores = (h @ w2 + b2)[..., 0]                               # (B, S)
    if attention_mask is not None:
        scores = jnp.where(attention_mask == 0, -1e9, scores)
    weights = jax.nn.softmax(scores, axis=1)                     # (B, S)
    return jnp.einsum("bs,bsh->bh", weights, hidden_states)


if __name__ == "__main__":
    key = jax.random.PRNGKey(0)
    k_hs, k_w1, k_b1, k_w2, k_b2, k_hs2, k_m2 = jax.random.split(key, 7)

    # --- Case 1: small shapes matching the module spec (single grid step) ---
    B, S, H = 2, 8, 32
    H2 = H // 2

    hidden_states = jax.random.normal(k_hs, (B, S, H), dtype=jnp.float32)
    attention_mask = jnp.array(
        [[1] * S, [1] * (S - 3) + [0] * 3], dtype=jnp.float32)

    w1 = jax.random.normal(k_w1, (H, H2), dtype=jnp.float32) * 0.1
    b1 = jax.random.normal(k_b1, (H2,), dtype=jnp.float32) * 0.1
    w2 = jax.random.normal(k_w2, (H2, 1), dtype=jnp.float32) * 0.1
    b2 = jax.random.normal(k_b2, (1,), dtype=jnp.float32) * 0.1

    out = jax.block_until_ready(
        attentive_pooling(hidden_states, attention_mask, w1, b1, w2, b2))
    ref = _reference(hidden_states, attention_mask, w1, b1, w2, b2)
    assert out.shape == (B, H)
    # approx=True reciprocal (EUP) leaves ~1e-3-level relative error.
    assert jnp.allclose(out, ref, atol=5e-3, rtol=5e-3), "mismatch (case 1)"

    # --- Case 2: multi-step grid + batch padding (f32) ----------------------
    B2 = 20
    hs2 = jax.random.normal(k_hs2, (B2, S, H), dtype=jnp.float32)
    mask2 = (jax.random.uniform(k_m2, (B2, S)) > 0.3).astype(jnp.float32)
    mask2 = mask2.at[:, 0].set(1.0)   # keep at least one valid position per row

    out2 = jax.block_until_ready(attentive_pooling(hs2, mask2, w1, b1, w2, b2))
    ref2 = _reference(hs2, mask2, w1, b1, w2, b2)
    assert out2.shape == (B2, H)
    assert jnp.allclose(out2, ref2, atol=5e-3, rtol=5e-3), "mismatch (case 2)"

    # --- Case 3: bf16 hidden_states stream (bf16-native MXU, half the DMA), --
    # --- no attention mask ---------------------------------------------------
    hs3 = hs2.astype(jnp.bfloat16)
    out3 = jax.block_until_ready(attentive_pooling(hs3, None, w1, b1, w2, b2))
    ref3 = _reference(hs3.astype(jnp.float32), None, w1, b1, w2, b2)
    assert out3.shape == (B2, H)
    assert jnp.allclose(out3, ref3, atol=3e-2, rtol=3e-2), "mismatch (case 3)"

    print("KERNEL_OK")
</pallas_src>

<mosaic_0001>
module attributes {stable_mosaic.version = 11 : i64} {
  func.func @_attentive_pool_kernel(%arg0: i32, %arg1: memref<2x8x32xf32, #tpu.memory_space<vmem>>, %arg2: memref<2x8xf32, #tpu.memory_space<vmem>>, %arg3: memref<32x128xf32, #tpu.memory_space<vmem>>, %arg4: memref<1x128xf32, #tpu.memory_space<vmem>>, %arg5: memref<1x128xf32, #tpu.memory_space<vmem>>, %arg6: memref<2x32xf32, #tpu.memory_space<vmem>>) attributes {dimension_semantics = [#tpu.dimension_semantics<parallel>], iteration_bounds = array<i64: 1>, scalar_prefetch = 0 : i64, scratch_operands = 0 : i64, tpu.core_type = #tpu.core_type<tc>, window_params = [{transform_indices = @transform_0, window_bounds = array<i64: 2, 8, 32>}, {transform_indices = @transform_1, window_bounds = array<i64: 2, 8>}, {pipeline_mode = #tpu.pipeline_mode<synchronous>, transform_indices = @transform_2, window_bounds = array<i64: 32, 128>}, {pipeline_mode = #tpu.pipeline_mode<synchronous>, transform_indices = @transform_3, window_bounds = array<i64: 1, 128>}, {pipeline_mode = #tpu.pipeline_mode<synchronous>, transform_indices = @transform_4, window_bounds = array<i64: 1, 128>}, {transform_indices = @transform_5, window_bounds = array<i64: 2, 32>}]} {
    %c0 = arith.constant 0 : index
    %c0_0 = arith.constant 0 : index
    %c0_1 = arith.constant 0 : index
    %0 = vector.load %arg1[%c0, %c0_0, %c0_1] : memref<2x8x32xf32, #tpu.memory_space<vmem>>, vector<2x8x32xf32>
    %1 = vector.shape_cast %0 : vector<2x8x32xf32> to vector<16x32xf32>
    %c0_2 = arith.constant 0 : index
    %c0_3 = arith.constant 0 : index
    %2 = vector.load %arg3[%c0_2, %c0_3] : memref<32x128xf32, #tpu.memory_space<vmem>>, vector<32x128xf32>
    %cst = arith.constant dense<0.000000e+00> : vector<16x128xf32>
    %3 = tpu.matmul %1, %2, %cst {dimension_numbers = #tpu.dot_dimension_numbers<[1], [0], [0], [1], [0, 0, 1, 1], [], []>} : vector<16x32xf32>, vector<32x128xf32>, vector<16x128xf32> -> vector<16x128xf32>
    %c0_4 = arith.constant 0 : index
    %c0_5 = arith.constant 0 : index
    %4 = vector.load %arg4[%c0_4, %c0_5] : memref<1x128xf32, #tpu.memory_space<vmem>>, vector<1x128xf32>
    %5 = vector.broadcast %4 : vector<1x128xf32> to vector<16x128xf32>
    %6 = arith.addf %3, %5 : vector<16x128xf32>
    %7 = math.tanh %6 : vector<16x128xf32>
    %8 = vector.shape_cast %7 : vector<16x128xf32> to vector<2x8x128xf32>
    %c0_6 = arith.constant 0 : index
    %c0_7 = arith.constant 0 : index
    %9 = vector.load %arg5[%c0_6, %c0_7] : memref<1x128xf32, #tpu.memory_space<vmem>>, vector<1x128xf32>
    %10 = vector.shape_cast %9 : vector<1x128xf32> to vector<1x1x128xf32>
    %11 = vector.broadcast %10 : vector<1x1x128xf32> to vector<2x8x128xf32>
    %12 = arith.mulf %8, %11 : vector<2x8x128xf32>
    %cst_8 = arith.constant dense<0.000000e+00> : vector<2x8xf32>
    %13 = vector.multi_reduction <add>, %12, %cst_8 [2] : vector<2x8x128xf32> to vector<2x8xf32>
    %c0_9 = arith.constant 0 : index
    %c0_10 = arith.constant 0 : index
    %14 = vector.load %arg2[%c0_9, %c0_10] : memref<2x8xf32, #tpu.memory_space<vmem>>, vector<2x8xf32>
    %15 = arith.addf %13, %14 : vector<2x8xf32>
    %cst_11 = arith.constant dense<0xFF800000> : vector<2xf32>
    %16 = vector.multi_reduction <maximumf>, %15, %cst_11 [1] : vector<2x8xf32> to vector<2xf32>
    %17 = vector.shape_cast %16 : vector<2xf32> to vector<2x1xf32>
    %18 = vector.broadcast %17 : vector<2x1xf32> to vector<2x8xf32>
    %19 = arith.subf %15, %18 : vector<2x8xf32>
    %20 = math.exp %19 : vector<2x8xf32>
    %cst_12 = arith.constant dense<0.000000e+00> : vector<2xf32>
    %21 = vector.multi_reduction <add>, %20, %cst_12 [1] : vector<2x8xf32> to vector<2xf32>
    %22 = vector.shape_cast %21 : vector<2xf32> to vector<2x1xf32>
    %23 = vector.shape_cast %20 : vector<2x8xf32> to vector<2x8x1xf32>
    %24 = vector.broadcast %23 : vector<2x8x1xf32> to vector<2x8x32xf32>
    %25 = arith.mulf %24, %0 : vector<2x8x32xf32>
    %cst_13 = arith.constant dense<0.000000e+00> : vector<2x32xf32>
    %26 = vector.multi_reduction <add>, %25, %cst_13 [1] : vector<2x8x32xf32> to vector<2x32xf32>
    %27 = tpu.reciprocal %22 {approx = true} : vector<2x1xf32> -> vector<2x1xf32>
    %28 = vector.broadcast %27 : vector<2x1xf32> to vector<2x32xf32>
    %29 = arith.mulf %26, %28 : vector<2x32xf32>
    %c0_14 = arith.constant 0 : index
    %c0_15 = arith.constant 0 : index
    %30 = vector.load %arg6[%c0_14, %c0_15] : memref<2x32xf32, #tpu.memory_space<vmem>>, vector<2x32xf32>
    tpu.vector_store %arg6[%c0_14, %c0_15], %29 {strides = array<i32>} : memref<2x32xf32, #tpu.memory_space<vmem>>, vector<2x32xf32>,
    return
  }
  func.func @transform_0(%arg0: i32) -> (i32, i32, i32) {
    %c0_i32 = arith.constant 0 : i32
    %c0_i32_0 = arith.constant 0 : i32
    %c0_i32_1 = arith.constant 0 : i32
    return %arg0, %c0_i32, %c0_i32_0 : i32, i32, i32
  }
  func.func @transform_1(%arg0: i32) -> (i32, i32) {
    %c0_i32 = arith.constant 0 : i32
    %c0_i32_0 = arith.constant 0 : i32
    return %arg0, %c0_i32 : i32, i32
  }
  func.func @transform_2(%arg0: i32) -> (i32, i32) {
    %c0_i32 = arith.constant 0 : i32
    %c0_i32_0 = arith.constant 0 : i32
    %c0_i32_1 = arith.constant 0 : i32
    return %c0_i32, %c0_i32_0 : i32, i32
  }
  func.func @transform_3(%arg0: i32) -> (i32, i32) {
    %c0_i32 = arith.constant 0 : i32
    %c0_i32_0 = arith.constant 0 : i32
    %c0_i32_1 = arith.constant 0 : i32
    return %c0_i32, %c0_i32_0 : i32, i32
  }
  func.func @transform_4(%arg0: i32) -> (i32, i32) {
    %c0_i32 = arith.constant 0 : i32
    %c0_i32_0 = arith.constant 0 : i32
    %c0_i32_1 = arith.constant 0 : i32
    return %c0_i32, %c0_i32_0 : i32, i32
  }
  func.func @transform_5(%arg0: i32) -> (i32, i32) {
    %c0_i32 = arith.constant 0 : i32
    %c0_i32_0 = arith.constant 0 : i32
    return %arg0, %c0_i32 : i32, i32
  }
}

</mosaic_0001>

<llo_original>
// kernel: tpu_custom_call.1
$region0: #{tpu_custom_call.1}
  #allocation0 [shape = 'u32[]', space=smem, size = 0x4, offset = 0x4, fixed_abs, tag = 'smem constant byte address 0x4 - core index']
  #allocation1 [shape = 'u32[144,128]{1,0:T(1,128)}', space=vmem, size = 0x12000, scoped, tag = 'internal scratch']
  %s0 = inlined_call_operand.hbm [shape: f32[2,8,32], index: 0, kind: input, shape index: {}]
  %s1 = inlined_call_operand.vmem [shape: f32[2,8], index: 1, kind: input, shape index: {}]
  %s2 = inlined_call_operand.hbm [shape: f32[32,128], index: 2, kind: input, shape index: {}]
  %s3 = inlined_call_operand.vmem [shape: f32[1,128], index: 3, kind: input, shape index: {}]
  %s4 = inlined_call_operand.vmem [shape: f32[1,128], index: 4, kind: input, shape index: {}]
  %s5 = inlined_call_operand.hbm [shape: f32[2,32], index: 5, kind: output, shape index: {}]
  %s6 = sld [smem:[#allocation0]]
  $region38: #{tpu_custom_call.1} parent=0
    _
  %s8 = ssub.s32 1, %s6
  %s9 = scalar_select 0, %s8, %s6
  $region1: #{tpu_custom_call.1} parent=0
    #allocation2 [shape = 'u8[8192]{0}', space=vmem, size = 0x2000, scoped, tag = 'input window, operand 0, single buffered']
    #allocation3 [shape = 's32[1]{0}', space=sflag, size = 0x4, scoped, tag = 'scoped memory for tpu_custom_call.1']
    #allocation4 [shape = 's32[1]{0}', space=sflag, size = 0x4, scoped, tag = 'scoped memory for tpu_custom_call.1']
    #allocation5 [shape = 'u8[16384]{0}', space=vmem, size = 0x4000, scoped, tag = 'input window, operand 2, single buffered']
    #allocation6 [shape = 's32[1]{0}', space=sflag, size = 0x4, scoped, tag = 'scoped memory for tpu_custom_call.1']
    #allocation7 [shape = 'u8[1024]{0}', space=vmem, size = 0x400, scoped, tag = 'output window, operand 0, single buffered']
    %10 = vsyncpa [#allocation3], 0
    %11 = vsyncpa [#allocation6], 0
    %12 = vsyncpa [#allocation4], 0
    // Predicated region
    $region2: #{tpu_custom_call.1} parent=1 // pred_check
      _
    $region3: #{tpu_custom_call.1} parent=1 // pred_check_branch
      %14 = sbr.rel (0) target = $region5
    $region4: #{tpu_custom_call.1} parent=1 // pred_region
      %s16 = ssub.s32 256, 256
      %17 = vsyncadd [#allocation3], %s16
      %s18 = sshll.u32 [#allocation2], 4
      %s19 = int_to_ptr.vmem [resolvable:$true] %s18
      %24 = dma.hbm_to_vmem [thread:$0]  %s0, 256, %s19, [#allocation3], 128, 128, 8
    $region5: #{tpu_custom_call.1} parent=1 // pred_fallthru
      _
    // Predicated region
    $region6: #{tpu_custom_call.1} parent=1 // pred_check
      _
    $region7: #{tpu_custom_call.1} parent=1 // pred_check_branch
      %26 = sbr.rel (0) target = $region9
    $region8: #{tpu_custom_call.1} parent=1 // pred_region
      _
    $region9: #{tpu_custom_call.1} parent=1 // pred_fallthru
      _
    // Predicated region
    $region10: #{tpu_custom_call.1} parent=1 // pred_check
      _
    $region11: #{tpu_custom_call.1} parent=1 // pred_check_branch
      %28 = sbr.rel (0) target = $region13
    $region12: #{tpu_custom_call.1} parent=1 // pred_region
      %s30 = ssub.s32 512, 512
      %31 = vsyncadd [#allocation6], %s30
      %s32 = sshll.u32 [#allocation5], 4
      %s33 = int_to_ptr.vmem [resolvable:$true] %s32
      %38 = dma.hbm_to_vmem [thread:$0]  %s2, 512, %s33, [#allocation6], 128, 128, 8
    $region13: #{tpu_custom_call.1} parent=1 // pred_fallthru
      _
    // Predicated region
    $region14: #{tpu_custom_call.1} parent=1 // pred_check
      _
    $region15: #{tpu_custom_call.1} parent=1 // pred_check_branch
      %40 = sbr.rel (0) target = $region17
    $region16: #{tpu_custom_call.1} parent=1 // pred_region
      _
    $region17: #{tpu_custom_call.1} parent=1 // pred_fallthru
      _
    // Predicated region
    $region18: #{tpu_custom_call.1} parent=1 // pred_check
      _
    $region19: #{tpu_custom_call.1} parent=1 // pred_check_branch
      %42 = sbr.rel (0) target = $region21
    $region20: #{tpu_custom_call.1} parent=1 // pred_region
      _
    $region21: #{tpu_custom_call.1} parent=1 // pred_fallthru
      _
    // Predicated region
    $region22: #{tpu_custom_call.1} parent=1 // pred_check
      _
    $region23: #{tpu_custom_call.1} parent=1 // pred_check_branch
      %44 = sbr.rel (0) target = $region25
    $region24: #{tpu_custom_call.1} parent=1 // pred_region
      %45 = dma.done [#allocation3], 256
    $region25: #{tpu_custom_call.1} parent=1 // pred_fallthru
      _
    // Predicated region
    $region26: #{tpu_custom_call.1} parent=1 // pred_check
      _
    $region27: #{tpu_custom_call.1} parent=1 // pred_check_branch
      %47 = sbr.rel (0) target = $region29
    $region28: #{tpu_custom_call.1} parent=1 // pred_region
      %48 = dma.done [#allocation6], 512
    $region29: #{tpu_custom_call.1} parent=1 // pred_fallthru
      _
    %v49 = vld [vmem:[#allocation2] sm:$0xff]
    %v50 = vld [vmem:[#allocation2 + $0x8] sm:$0xff]
    %v51 = vld [vmem:[#allocation5] sm:$0xff]
    %v52 = vld [vmem:[#allocation5 + $0x8] sm:$0xff]
    %v53 = vld [vmem:[#allocation5 + $0x10] sm:$0xff]
    %v54 = vld [vmem:[#allocation5 + $0x18] sm:$0xff]
    %v55 = vld [vmem:[%s3] sm:$0x1]
    %v57 = vlaneseq
    %v58 = vshrl.u32 %v57, 7
    %v59 = vsub.s32 0, %v58
    %v60 = vrot.slane %v55, %v59
    %vm62 = vcmask 261120
    %v64 = vsel %vm62, %v49, 0
    %v67 = vsel %vm62, %v50, 0
    %69 = vmatprep.subr.mxu0 0.0
    %70 = vmatpush1.msra.mxu0 %v51
    %71 = vmatprep.subr.mxu0 0.0
    %72 = vmatpush1.msra.mxu0 %v52
    %73 = vmatprep.subr.mxu0 0.0
    %74 = vmatpush1.msra.mxu0 %v53
    %75 = vmatprep.subr.mxu0 0.0
    %76 = vmatpush1.msra.mxu0 %v54
    %77 = vmatprep.subr.mxu0 0.0
    %78 = vmatpush1.msra.mxu0 0.0
    %79 = vmatprep.subr.mxu0 0.0
    %80 = vmatpush1.msra.mxu0 0.0
    %81 = vmatprep.subr.mxu0 0.0
    %82 = vmatpush1.msra.mxu0 0.0
    %83 = vmatprep.subr.mxu0 0.0
    %84 = vmatpush1.msra.mxu0 0.0
    %85 = vmatprep.subr.mxu0 0.0
    %86 = vmatpush1.msra.mxu0 0.0
    %87 = vmatprep.subr.mxu0 0.0
    %88 = vmatpush1.msra.mxu0 0.0
    %89 = vmatprep.subr.mxu0 0.0
    %90 = vmatpush1.msra.mxu0 0.0
    %91 = vmatprep.subr.mxu0 0.0
    %92 = vmatpush1.msra.mxu0 0.0
    %93 = vmatprep.subr.mxu0 0.0
    %94 = vmatpush1.msra.mxu0 0.0
    %95 = vmatprep.subr.mxu0 0.0
    %96 = vmatpush1.msra.mxu0 0.0
    %97 = vmatprep.subr.mxu0 0.0
    %98 = vmatpush1.msra.mxu0 0.0
    %99 = vmatprep.subr.mxu0 0.0
    %100 = vmatpush1.msra.mxu0 0.0
    %101 = vmatprep.subr.mxu0 0.0
    %102 = vmatpush1.msra.mxu0 0.0
    %103 = vmatprep.subr.mxu0 0.0
    %104 = vmatpush1.msra.mxu0 0.0
    %105 = vmatprep.subr.mxu0 0.0
    %106 = vmatpush1.msra.mxu0 0.0
    %107 = vmatprep.subr.mxu0 0.0
    %108 = vmatpush1.msra.mxu0 0.0
    %109 = vmatprep.subr.mxu0 0.0
    %110 = vmatpush1.msra.mxu0 0.0
    %111 = vmatprep.subr.mxu0 0.0
    %112 = vmatpush1.msra.mxu0 0.0
    %113 = vmatprep.subr.mxu0 0.0
    %114 = vmatpush1.msra.mxu0 0.0
    %115 = vmatprep.subr.mxu0 0.0
    %116 = vmatpush1.msra.mxu0 0.0
    %117 = vmatprep.subr.mxu0 0.0
    %118 = vmatpush1.msra.mxu0 0.0
    %119 = vmatprep.subr.mxu0 0.0
    %120 = vmatpush1.msra.mxu0 0.0
    %121 = vmatprep.subr.mxu0 0.0
    %122 = vmatpush1.msra.mxu0 0.0
    %123 = vmatprep.subr.mxu0 0.0
    %124 = vmatpush1.msra.mxu0 0.0
    %125 = vmatprep.subr.mxu0 0.0
    %126 = vmatpush1.msra.mxu0 0.0
    %127 = vmatprep.subr.mxu0 0.0
    %128 = vmatpush1.msra.mxu0 0.0
    %129 = vmatprep.subr.mxu0 0.0
    %130 = vmatpush1.msra.mxu0 0.0
    %131 = vmatprep.subr.mxu0 0.0
    %132 = vmatpush1.msra.mxu0 0.0
    %133 = vmatprep.mubr.f32.mxu0 0.0
    %134 = vmatmul.mubr.f32.gmra.mrb[0].mxu0 %v64
    %v135 = vpop.f32.mrb[0].mxu0
    %v136 = vadd.f32 %v60, %v135
    %v137 = vpop.f32.mrb[0].mxu0
    %138 = vmatprep.mubr.f32.mxu0 0.0
    %139 = vmatmul.mubr.f32.gmra.mrb[0].mxu0 %v67
    %v140 = vpop.f32.mrb[0].mxu0
    %v141 = vadd.f32 %v60, %v140
    %v142 = vpop.f32.mrb[0].mxu0
    %143 = vdwg.mxu0
    %v144 = vtanh.pop %v136
    %v145 = vtanh.pop %v141
    %v146 = vld [vmem:[%s4] sm:$0x1]
    %v148 = vlaneseq
    %v149 = vshrl.u32 %v148, 7
    %v150 = vsub.s32 0, %v149
    %v151 = vrot.slane %v146, %v150
    %v153 = vmul.f32 %v144, %v151
    %v154 = vmul.f32 %v145, %v151
    %155 = vadd.xlane.f32.xlu0 %v153
    %v156 = vpop.xlane.xlu0 %155
    %157 = vadd.xlane.f32.xlu0 %v154
    %v158 = vpop.xlane.xlu0 %157
    %v159 = vld [vmem:[%s1] sm:$0x3]
    %v161 = vlaneseq
    %v162 = vshrl.u32 %v161, 7
    %v163 = vsub.s32 0, %v162
    %v164 = vrot.slane %v159, %v163
    %166 = vbcast.lane.b32.xlu0 %v164, 256
    %v167 = vpop.permute.xlu0 %166
    %v168 = vlaneseq
    %v169 = vshrl.u32 %v168, 7
    %v170 = vsub.s32 1, %v169
    %v171 = vrot.slane %v159, %v170
    %173 = vbcast.lane.b32.xlu0 %v171, 256
    %v174 = vpop.permute.xlu0 %173
    %v177 = vadd.f32 %v156, %v167
    %v178 = vadd.f32 %v158, %v174
    %181 = vset.pattern.permute.xlu0 0
    %182 = vperm.xlu0 %181, %v177
    %v183 = vpop.permute.xlu0 %182
    %184 = vset.pattern.permute.xlu0 0
    %185 = vperm.xlu0 %184, %v178
    %v186 = vpop.permute.xlu0 %185
    %v187 = vlaneseq
    %v188 = vand.u32 %v187, 127
    %v189 = vlaneseq
    %v190 = vshrl.u32 %v189, 7
    %v191 = vsub.s32 %v188, %v190
    %v192 = vrot.slane %v183, %v191
    %v193 = vlaneseq
    %v194 = vshrl.u32 %v193, 7
    %v195 = vsub.s32 %v188, %v194
    %v196 = vrot.slane %v186, %v195
    %vm197 = vcmask 1041409
    %v198 = vsel %vm197, %v196, %v192
    %vm200 = vcmask 58368
    %v201 = vsel %vm200, %v198, -inf
    %202 = vmax.xlane.f32.xlu0 %v201
    %v203 = vpop.xlane.xlu0 %202
    %v205 = vlaneseq
    %v206 = vshrl.u32 %v205, 7
    %v207 = vsub.s32 0, %v206
    %v208 = vrot.slane %v203, %v207
    %v209 = vlaneseq
    %v210 = vshrl.u32 %v209, 7
    %v211 = vsub.s32 1, %v210
    %v212 = vrot.slane %v203, %v211
    %v215 = vsub.f32 %v177, %v208
    %v216 = vsub.f32 %v178, %v212
    %v217 = vmul.f32 %v215, 1.442695
    %v218 = vpow.pop %v217
    %v219 = vmul.f32 %v216, 1.442695
    %v220 = vpow.pop %v219
    %223 = vset.pattern.permute.xlu0 0
    %224 = vperm.xlu0 %223, %v218
    %v225 = vpop.permute.xlu0 %224
    %226 = vset.pattern.permute.xlu0 0
    %227 = vperm.xlu0 %226, %v220
    %v228 = vpop.permute.xlu0 %227
    %v229 = vlaneseq
    %v230 = vshrl.u32 %v229, 7
    %v231 = vsub.s32 %v188, %v230
    %v232 = vrot.slane %v225, %v231
    %v233 = vlaneseq
    %v234 = vshrl.u32 %v233, 7
    %v235 = vsub.s32 %v188, %v234
    %v236 = vrot.slane %v228, %v235
    %v237 = vsel %vm197, %v236, %v232
    %v239 = vsel %vm200, %v237, 0.0
    %240 = vadd.xlane.f32.xlu0 %v239
    %v241 = vpop.xlane.xlu0 %240
    %v244 = vmul.f32 %v225, %v49
    %v245 = vmul.f32 %v228, %v50
    %v246 = vsel %vm62, %v244, 0.0
    %v247 = vrot.slane %v246, 4
    %v248 = vadd.f32 %v246, %v247
    %v249 = vrot.slane %v248, 2
    %v250 = vadd.f32 %v248, %v249
    %v251 = vrot.slane %v250, 1
    %v252 = vadd.f32 %v250, %v251
    %v253 = vsel %vm62, %v245, 0.0
    %v254 = vrot.slane %v253, 4
    %v255 = vadd.f32 %v253, %v254
    %v256 = vrot.slane %v255, 2
    %v257 = vadd.f32 %v255, %v256
    %v258 = vrot.slane %v257, 1
    %v259 = vadd.f32 %v257, %v258
    %v260 = vrcp.pop %v241
    %v262 = vrot.slane %v260, 1
    %v265 = vmul.f32 %v252, %v260
    %v266 = vmul.f32 %v259, %v262
    %v269 = vrot.slane %v266, 7
    %v270 = vsel %vm197, %v269, %v265
    %vm272 = vcmask 254976
    %273 = vst.msk [vmem:[#allocation7] sm:$0x3] %vm272, %v270
    // Predicated region
    $region30: #{tpu_custom_call.1} parent=1 // pred_check
      _
    $region31: #{tpu_custom_call.1} parent=1 // pred_check_branch
      %275 = sbr.rel (0) target = $region33
    $region32: #{tpu_custom_call.1} parent=1 // pred_region
      %s277 = ssub.s32 32, 32
      %278 = vsyncadd [#allocation4], %s277
      %s280 = sshll.u32 [#allocation7], 4
      %s281 = int_to_ptr.vmem [resolvable:$true] %s280
      %283 = dma.vmem_to_hbm [thread:$0]  %s281, 32, %s5, [#allocation4]
    $region33: #{tpu_custom_call.1} parent=1 // pred_fallthru
      _
    // Predicated region
    $region34: #{tpu_custom_call.1} parent=1 // pred_check
      _
    $region35: #{tpu_custom_call.1} parent=1 // pred_check_branch
      %285 = sbr.rel (0) target = $region37
    $region36: #{tpu_custom_call.1} parent=1 // pred_region
      %286 = dma.done [#allocation4], 32
    $region37: #{tpu_custom_call.1} parent=1 // pred_fallthru
      _
    %287 = vsyncpa [#allocation3], 1
    %288 = vsyncpa [#allocation6], 1
    %289 = vsyncpa [#allocation4], 1

</llo_original>
